<compile_context>
chip_gen: v7x
topology: tpu7x:2x2x1
jax: 0.10.0
libtpu: 0.0.40
codegen_flags: <defaults>
</compile_context>

<pallas_src>
import functools

import jax
import jax.numpy as jnp
from jax import lax
from jax.experimental import pallas as pl
from jax.experimental.pallas import tpu as pltpu

_LANE = 128
_SUB = 8


def _partial_kernel(pred_ref, tgt_ref, out_ref, *, tile, chunk, n_chunks, rows,
                    need_row_mask, count_on_mxu):
    """Per grid step: accumulate four (8,128) partial blocks over `tile` rows.

    Output block layout (32, 128):
      rows  0- 7: per-sublane partial counts of (target == 1)
      rows  8-15: per-sublane partial counts of (target == 0)
      rows 16-23: per-sublane partial sums of BCE over (target == 1)
      rows 24-31: per-sublane partial sums of BCE over (target == 0)
    Summing every 8-row group over all elements gives the global quantity.
    """
    if need_row_mask:
        # Valid rows remaining in this tile (may exceed `tile` for non-last blocks).
        rows_left = rows - pl.program_id(0) * tile

    if count_on_mxu:
        # One-hot selector: row 0 is ones -> dot() = column sums, rows 1-7 stay zero.
        sel = (lax.broadcasted_iota(jnp.int32, (_SUB, chunk), 0) == 0).astype(
            jnp.bfloat16)

    def colsum8(v):
        # (chunk, 128) f32 -> (8, 128) per-sublane partials; pure vreg adds (VALU).
        if chunk % _SUB == 0 and chunk >= _SUB:
            return jnp.sum(v.reshape(chunk // _SUB, _SUB, _LANE), axis=0)
        r = jnp.sum(v, axis=0, keepdims=True)                       # tiny-input path
        return jnp.concatenate([r, jnp.zeros((_SUB - 1, _LANE), jnp.float32)], axis=0)

    def body(c, carry):
        pc, nc, pb, nb = carry
        start = pl.multiple_of(c * chunk, chunk)
        x = pred_ref[pl.ds(start, chunk), :].astype(jnp.float32)    # logits (f32 math)
        t = tgt_ref[pl.ds(start, chunk), :]                         # native dtype

        pos = t == 1
        neg = t == 0
        if need_row_mask:
            # Cheap mask: sublane iota vs scalar; garbage rows of the padded last
            # block are discarded by the selects below (true selects, NaN-safe).
            row = lax.broadcasted_iota(jnp.int32, (chunk, 1), 0) + c * chunk
            valid = row < rows_left
            pos = jnp.logical_and(pos, valid)
            neg = jnp.logical_and(neg, valid)

        # Numerically stable BCE-with-logits, split by target value (no x*t mul):
        #   target == 0 : softplus(x)  = max(x,0) + log1p(exp(-|x|))
        #   target == 1 : softplus(-x) = softplus(x) - x
        sp = jnp.maximum(x, 0.0) + jnp.log1p(jnp.exp(-jnp.abs(x)))

        if count_on_mxu:
            # Exact: {0,1} masks are bf16-representable, MXU accumulates in f32.
            pc = pc + jnp.dot(sel, pos.astype(jnp.bfloat16),
                              preferred_element_type=jnp.float32)
            nc = nc + jnp.dot(sel, neg.astype(jnp.bfloat16),
                              preferred_element_type=jnp.float32)
        else:
            pc = pc + colsum8(pos.astype(jnp.float32))
            nc = nc + colsum8(neg.astype(jnp.float32))
        pb = pb + colsum8(jnp.where(pos, sp - x, 0.0))
        nb = nb + colsum8(jnp.where(neg, sp, 0.0))
        return pc, nc, pb, nb

    zero = jnp.zeros((_SUB, _LANE), jnp.float32)
    pc, nc, pb, nb = lax.fori_loop(0, n_chunks, body, (zero, zero, zero, zero),
                                   unroll=True)

    out_ref[0:_SUB, :] = pc
    out_ref[_SUB:2 * _SUB, :] = nc
    out_ref[2 * _SUB:3 * _SUB, :] = pb
    out_ref[3 * _SUB:4 * _SUB, :] = nb


def _on_v7():
    try:
        return "v7" in jax.devices()[0].device_kind.lower()
    except Exception:  # pragma: no cover - defensive
        return False


def _kernel_partial_sums(pred2d, tgt2d, tile_rows, chunk_rows):
    """Run the Pallas kernel over a lane-aligned (rows, 128) view; returns (4,) sums."""
    rows = int(pred2d.shape[0])

    if rows <= chunk_rows:
        chunk = rows
        tile = rows
    else:
        chunk = max(_SUB, (int(chunk_rows) // _SUB) * _SUB)
        tile = max(chunk, (min(int(tile_rows), rows) // chunk) * chunk)
    n_chunks = tile // chunk
    grid = pl.cdiv(rows, tile)
    need_row_mask = (grid * tile) != rows
    count_on_mxu = (chunk % _SUB == 0) and (chunk >= 128)

    kernel = functools.partial(
        _partial_kernel, tile=tile, chunk=chunk, n_chunks=n_chunks, rows=rows,
        need_row_mask=need_row_mask, count_on_mxu=count_on_mxu)

    def run(dim_semantics):
        return pl.pallas_call(
            kernel,
            out_shape=jax.ShapeDtypeStruct((grid * 4 * _SUB, _LANE), jnp.float32),
            grid_spec=pltpu.PrefetchScalarGridSpec(
                num_scalar_prefetch=0,
                grid=(grid,),
                in_specs=[pl.BlockSpec((tile, _LANE), lambda i: (i, 0)),
                          pl.BlockSpec((tile, _LANE), lambda i: (i, 0))],
                out_specs=pl.BlockSpec((4 * _SUB, _LANE), lambda i: (i, 0)),
            ),
            compiler_params=pltpu.CompilerParams(
                dimension_semantics=dim_semantics,
                vmem_limit_bytes=32 * 1024 * 1024,
            ),
        )(pred2d, tgt2d)

    if grid > 1 and _on_v7():
        # v7x has two TensorCores: shard the (independent) grid axis across them.
        try:
            partials = run((pltpu.CORE_PARALLEL,))
        except Exception:
            partials = run(("parallel",))
    else:
        partials = run(("parallel",))

    # Tiny final combine over lane-dense partials.
    return jnp.sum(partials.reshape(grid, 4, _SUB, _LANE), axis=(0, 2, 3))


def _tail_partial_sums(x_tail, t_tail):
    """Plain-JAX partial sums for the (<128 element) lane-remainder tail."""
    x = x_tail.astype(jnp.float32)
    t = t_tail
    pos = t == 1
    neg = t == 0
    sp = jnp.maximum(x, 0.0) + jnp.log1p(jnp.exp(-jnp.abs(x)))
    return jnp.stack([jnp.sum(pos.astype(jnp.float32)),
                      jnp.sum(neg.astype(jnp.float32)),
                      jnp.sum(jnp.where(pos, sp - x, 0.0)),
                      jnp.sum(jnp.where(neg, sp, 0.0))])


def boundary_loss(bd_pre, bd_gt, coeff_bce=20.0, tile_rows=4096, chunk_rows=512):
    """JAX/Pallas equivalent of BondaryLoss(coeff_bce)(bd_pre, bd_gt).

    bd_pre: (N, 1, H, W) logits (any float dtype; math runs in f32 in-kernel).
    bd_gt : any shape with the same element count; values in {0, 1} are weighted,
            anything else gets zero weight (matches PyTorch).
    For best performance wrap the call in jax.jit (the reshapes below are then free).
    """
    n, c, h, w = bd_pre.shape
    # Dropping the NHWC permute is only valid because C == 1 (pairing unchanged).
    assert c == 1, "boundary head must have a single channel (C == 1)"

    flat_pred = bd_pre.reshape(-1)
    flat_tgt = bd_gt.reshape(-1)
    total = int(flat_pred.shape[0])
    assert int(flat_tgt.shape[0]) == total, "bd_gt must match bd_pre's element count"

    rem = total % _LANE
    aligned = total - rem

    sums = jnp.zeros((4,), jnp.float32)
    if aligned:
        if rem:
            pred2d = flat_pred[:aligned].reshape(aligned // _LANE, _LANE)
            tgt2d = flat_tgt[:aligned].reshape(aligned // _LANE, _LANE)
        else:  # common case: pure metadata reshape, no pad / no slice copy
            pred2d = flat_pred.reshape(aligned // _LANE, _LANE)
            tgt2d = flat_tgt.reshape(aligned // _LANE, _LANE)
        sums = sums + _kernel_partial_sums(pred2d, tgt2d, tile_rows, chunk_rows)
    if rem:
        sums = sums + _tail_partial_sums(flat_pred[aligned:], flat_tgt[aligned:])

    pos_n, neg_n, pos_b, neg_b = sums[0], sums[1], sums[2], sums[3]
    # NOTE: if there are no {0,1} labels at all, sum_n == 0 -> NaN (matches PyTorch).
    sum_n = pos_n + neg_n
    wsum = (neg_n / sum_n) * pos_b + (pos_n / sum_n) * neg_b
    return (coeff_bce * wsum / jnp.float32(total)).astype(jnp.float32)


def _reference_boundary_loss(bd_pre, bd_gt, coeff_bce=20.0):
    """Pure-JAX reference mirroring the PyTorch code, for verification."""
    log_p = jnp.transpose(bd_pre, (0, 2, 3, 1)).reshape(-1).astype(jnp.float32)
    t = bd_gt.reshape(-1).astype(jnp.float32)
    pos = t == 1.0
    neg = t == 0.0
    pos_num = jnp.sum(pos.astype(jnp.float32))
    neg_num = jnp.sum(neg.astype(jnp.float32))
    sum_num = pos_num + neg_num
    weight = jnp.where(pos, neg_num / sum_num, jnp.where(neg, pos_num / sum_num, 0.0))
    x = log_p
    bce = jnp.maximum(x, 0.0) - x * t + jnp.log1p(jnp.exp(-jnp.abs(x)))
    return coeff_bce * jnp.mean(weight * bce)


if __name__ == "__main__":
    key = jax.random.PRNGKey(0)

    def make_inputs(k, n, h, w, pred_dtype=jnp.float32):
        k1, k2 = jax.random.split(k)
        bd_pre = jax.random.normal(k1, (n, 1, h, w), dtype=jnp.float32).astype(pred_dtype)
        r = jax.random.uniform(k2, (n, h, w))
        # mostly {0,1}, some "ignore" values (=2) -> exercises zero-weight branch
        bd_gt = jnp.where(r > 0.9, 2.0, jnp.where(r > 0.6, 1.0, 0.0)).astype(jnp.float32)
        return bd_pre, bd_gt

    ks = jax.random.split(key, 4)

    # (a) tiny single-block case (512 elements, full-array block).
    bd_pre, bd_gt = make_inputs(ks[0], 2, 16, 16)
    out = jax.block_until_ready(boundary_loss(bd_pre, bd_gt, coeff_bce=20.0))
    ref = jax.block_until_ready(_reference_boundary_loss(bd_pre, bd_gt, 20.0))
    assert jnp.allclose(out, ref, rtol=1e-4, atol=1e-5), (out, ref)

    # (b) ragged element count (207) -> plain-JAX tail epilogue path.
    bd_pre, bd_gt = make_inputs(ks[1], 1, 23, 9)
    out = jax.block_until_ready(boundary_loss(bd_pre, bd_gt, coeff_bce=20.0))
    ref = jax.block_until_ready(_reference_boundary_loss(bd_pre, bd_gt, 20.0))
    assert jnp.allclose(out, ref, rtol=1e-4, atol=1e-5), (out, ref)

    # (c) multi-block grid + ragged rows (in-kernel row mask) + chunked inner loop.
    bd_pre, bd_gt = make_inputs(ks[2], 2, 80, 96)
    out = jax.block_until_ready(
        boundary_loss(bd_pre, bd_gt, coeff_bce=20.0, tile_rows=64, chunk_rows=32))
    ref = jax.block_until_ready(_reference_boundary_loss(bd_pre, bd_gt, 20.0))
    assert jnp.allclose(out, ref, rtol=1e-4, atol=1e-5), (out, ref)

    # (d) default tiling, bf16 logits (native-dtype input), MXU-offloaded counts.
    bd_pre, bd_gt = make_inputs(ks[3], 1, 256, 512, pred_dtype=jnp.bfloat16)
    out = jax.block_until_ready(boundary_loss(bd_pre, bd_gt, coeff_bce=20.0))
    ref = jax.block_until_ready(_reference_boundary_loss(bd_pre, bd_gt, 20.0))
    assert jnp.allclose(out, ref, rtol=1e-4, atol=1e-5), (out, ref)

    print("KERNEL_OK")
</pallas_src>

<mosaic_0001>
module attributes {stable_mosaic.version = 11 : i64} {
  func.func @_partial_kernel(%arg0: i32, %arg1: memref<4x128xf32, #tpu.memory_space<vmem>>, %arg2: memref<4x128xf32, #tpu.memory_space<vmem>>, %arg3: memref<32x128xf32, #tpu.memory_space<vmem>>) attributes {dimension_semantics = [#tpu.dimension_semantics<parallel>], iteration_bounds = array<i64: 1>, scalar_prefetch = 0 : i64, scratch_operands = 0 : i64, tpu.core_type = #tpu.core_type<tc>, window_params = [{transform_indices = @transform_0, window_bounds = array<i64: 4, 128>}, {transform_indices = @transform_1, window_bounds = array<i64: 4, 128>}, {transform_indices = @transform_2, window_bounds = array<i64: 32, 128>}]} {
    %cst = arith.constant 0.000000e+00 : f32
    %0 = vector.broadcast %cst : f32 to vector<8x128xf32>
    %c0_i32 = arith.constant 0 : i32
    %c4_i32 = arith.constant 4 : i32
    %1 = arith.muli %c0_i32, %c4_i32 : i32
    %2 = tpu.assume_multiple %1, 4 : i32
    %3 = arith.index_cast %2 : i32 to index
    %c0 = arith.constant 0 : index
    %4 = vector.load %arg1[%3, %c0] : memref<4x128xf32, #tpu.memory_space<vmem>>, vector<4x128xf32>
    %5 = arith.index_cast %2 : i32 to index
    %c0_0 = arith.constant 0 : index
    %6 = vector.load %arg2[%5, %c0_0] : memref<4x128xf32, #tpu.memory_space<vmem>>, vector<4x128xf32>
    %cst_1 = arith.constant 1.000000e+00 : f32
    %7 = vector.broadcast %cst_1 : f32 to vector<4x128xf32>
    %8 = arith.cmpf oeq, %6, %7 : vector<4x128xf32>
    %cst_2 = arith.constant 0.000000e+00 : f32
    %9 = vector.broadcast %cst_2 : f32 to vector<4x128xf32>
    %10 = arith.cmpf oeq, %6, %9 : vector<4x128xf32>
    %cst_3 = arith.constant 0.000000e+00 : f32
    %11 = vector.broadcast %cst_3 : f32 to vector<4x128xf32>
    %12 = arith.maximumf %4, %11 : vector<4x128xf32>
    %13 = math.absf %4 : vector<4x128xf32>
    %cst_4 = arith.constant 0.000000e+00 : f32
    %14 = vector.broadcast %cst_4 : f32 to vector<4x128xf32>
    %15 = arith.subf %14, %13 : vector<4x128xf32>
    %16 = math.exp %15 : vector<4x128xf32>
    %17 = math.log1p %16 : vector<4x128xf32>
    %18 = arith.addf %12, %17 : vector<4x128xf32>
    %19 = arith.extui %8 : vector<4x128xi1> to vector<4x128xi32>
    %20 = arith.sitofp %19 : vector<4x128xi32> to vector<4x128xf32>
    %cst_5 = arith.constant dense<0.000000e+00> : vector<128xf32>
    %21 = vector.multi_reduction <add>, %20, %cst_5 [0] : vector<4x128xf32> to vector<128xf32>
    %22 = vector.shape_cast %21 : vector<128xf32> to vector<1x128xf32>
    %cst_6 = arith.constant 0.000000e+00 : f32
    %23 = vector.broadcast %cst_6 : f32 to vector<7x128xf32>
    %24 = tpu.concatenate %22, %23 in 0 : vector<1x128xf32>, vector<7x128xf32> -> vector<8x128xf32>
    %25 = arith.addf %0, %24 : vector<8x128xf32>
    %26 = arith.extui %10 : vector<4x128xi1> to vector<4x128xi32>
    %27 = arith.sitofp %26 : vector<4x128xi32> to vector<4x128xf32>
    %cst_7 = arith.constant dense<0.000000e+00> : vector<128xf32>
    %28 = vector.multi_reduction <add>, %27, %cst_7 [0] : vector<4x128xf32> to vector<128xf32>
    %29 = vector.shape_cast %28 : vector<128xf32> to vector<1x128xf32>
    %cst_8 = arith.constant 0.000000e+00 : f32
    %30 = vector.broadcast %cst_8 : f32 to vector<7x128xf32>
    %31 = tpu.concatenate %29, %30 in 0 : vector<1x128xf32>, vector<7x128xf32> -> vector<8x128xf32>
    %32 = arith.addf %0, %31 : vector<8x128xf32>
    %33 = arith.subf %18, %4 : vector<4x128xf32>
    %cst_9 = arith.constant 0.000000e+00 : f32
    %34 = vector.broadcast %cst_9 : f32 to vector<4x128xf32>
    %35 = arith.select %8, %33, %34 : vector<4x128xi1>, vector<4x128xf32>
    %cst_10 = arith.constant dense<0.000000e+00> : vector<128xf32>
    %36 = vector.multi_reduction <add>, %35, %cst_10 [0] : vector<4x128xf32> to vector<128xf32>
    %37 = vector.shape_cast %36 : vector<128xf32> to vector<1x128xf32>
    %cst_11 = arith.constant 0.000000e+00 : f32
    %38 = vector.broadcast %cst_11 : f32 to vector<7x128xf32>
    %39 = tpu.concatenate %37, %38 in 0 : vector<1x128xf32>, vector<7x128xf32> -> vector<8x128xf32>
    %40 = arith.addf %0, %39 : vector<8x128xf32>
    %cst_12 = arith.constant 0.000000e+00 : f32
    %41 = vector.broadcast %cst_12 : f32 to vector<4x128xf32>
    %42 = arith.select %10, %18, %41 : vector<4x128xi1>, vector<4x128xf32>
    %cst_13 = arith.constant dense<0.000000e+00> : vector<128xf32>
    %43 = vector.multi_reduction <add>, %42, %cst_13 [0] : vector<4x128xf32> to vector<128xf32>
    %44 = vector.shape_cast %43 : vector<128xf32> to vector<1x128xf32>
    %cst_14 = arith.constant 0.000000e+00 : f32
    %45 = vector.broadcast %cst_14 : f32 to vector<7x128xf32>
    %46 = tpu.concatenate %44, %45 in 0 : vector<1x128xf32>, vector<7x128xf32> -> vector<8x128xf32>
    %47 = arith.addf %0, %46 : vector<8x128xf32>
    %c1_i32 = arith.constant 1 : i32
    %c0_15 = arith.constant 0 : index
    %c0_16 = arith.constant 0 : index
    %48 = vector.load %arg3[%c0_15, %c0_16] : memref<32x128xf32, #tpu.memory_space<vmem>>, vector<8x128xf32>
    tpu.vector_store %arg3[%c0_15, %c0_16], %25 {strides = array<i32>} : memref<32x128xf32, #tpu.memory_space<vmem>>, vector<8x128xf32>,
    %c8 = arith.constant 8 : index
    %c0_17 = arith.constant 0 : index
    %49 = vector.load %arg3[%c8, %c0_17] : memref<32x128xf32, #tpu.memory_space<vmem>>, vector<8x128xf32>
    tpu.vector_store %arg3[%c8, %c0_17], %32 {strides = array<i32>} : memref<32x128xf32, #tpu.memory_space<vmem>>, vector<8x128xf32>,
    %c16 = arith.constant 16 : index
    %c0_18 = arith.constant 0 : index
    %50 = vector.load %arg3[%c16, %c0_18] : memref<32x128xf32, #tpu.memory_space<vmem>>, vector<8x128xf32>
    tpu.vector_store %arg3[%c16, %c0_18], %40 {strides = array<i32>} : memref<32x128xf32, #tpu.memory_space<vmem>>, vector<8x128xf32>,
    %c24 = arith.constant 24 : index
    %c0_19 = arith.constant 0 : index
    %51 = vector.load %arg3[%c24, %c0_19] : memref<32x128xf32, #tpu.memory_space<vmem>>, vector<8x128xf32>
    tpu.vector_store %arg3[%c24, %c0_19], %47 {strides = array<i32>} : memref<32x128xf32, #tpu.memory_space<vmem>>, vector<8x128xf32>,
    return
  }
  func.func @transform_0(%arg0: i32) -> (i32, i32) {
    %c0_i32 = arith.constant 0 : i32
    %c0_i32_0 = arith.constant 0 : i32
    return %arg0, %c0_i32 : i32, i32
  }
  func.func @transform_1(%arg0: i32) -> (i32, i32) {
    %c0_i32 = arith.constant 0 : i32
    %c0_i32_0 = arith.constant 0 : i32
    return %arg0, %c0_i32 : i32, i32
  }
  func.func @transform_2(%arg0: i32) -> (i32, i32) {
    %c0_i32 = arith.constant 0 : i32
    %c0_i32_0 = arith.constant 0 : i32
    return %arg0, %c0_i32 : i32, i32
  }
}

</mosaic_0001>

<llo_original>
// kernel: tpu_custom_call.1
$region0: #{tpu_custom_call.1}
  #allocation0 [shape = 'u32[]', space=smem, size = 0x4, offset = 0x4, fixed_abs, tag = 'smem constant byte address 0x4 - core index']
  #allocation1 [shape = 'u32[144,128]{1,0:T(1,128)}', space=vmem, size = 0x12000, scoped, tag = 'internal scratch']
  %s0 = inlined_call_operand.hbm [shape: f32[4,128], index: 0, kind: input, shape index: {}]
  %s1 = inlined_call_operand.hbm [shape: f32[4,128], index: 1, kind: input, shape index: {}]
  %s2 = inlined_call_operand.hbm [shape: f32[32,128], index: 2, kind: output, shape index: {}]
  %s3 = sld [smem:[#allocation0]]
  $region26: #{tpu_custom_call.1} parent=0
    _
  %s5 = ssub.s32 1, %s3
  %s6 = scalar_select 0, %s5, %s3
  $region1: #{tpu_custom_call.1} parent=0
    #allocation2 [shape = 'u8[2048]{0}', space=vmem, size = 0x800, scoped, tag = 'input window, operand 0, single buffered']
    #allocation3 [shape = 's32[1]{0}', space=sflag, size = 0x4, scoped, tag = 'scoped memory for tpu_custom_call.1']
    #allocation4 [shape = 's32[1]{0}', space=sflag, size = 0x4, scoped, tag = 'scoped memory for tpu_custom_call.1']
    #allocation5 [shape = 'u8[2048]{0}', space=vmem, size = 0x800, scoped, tag = 'input window, operand 1, single buffered']
    #allocation6 [shape = 's32[1]{0}', space=sflag, size = 0x4, scoped, tag = 'scoped memory for tpu_custom_call.1']
    #allocation7 [shape = 'u8[16384]{0}', space=vmem, size = 0x4000, scoped, tag = 'output window, operand 0, single buffered']
    %7 = vsyncpa [#allocation3], 0
    %8 = vsyncpa [#allocation6], 0
    %9 = vsyncpa [#allocation4], 0
    // Predicated region
    $region2: #{tpu_custom_call.1} parent=1 // pred_check
      _
    $region3: #{tpu_custom_call.1} parent=1 // pred_check_branch
      %11 = sbr.rel (0) target = $region5
    $region4: #{tpu_custom_call.1} parent=1 // pred_region
      %s13 = ssub.s32 64, 64
      %14 = vsyncadd [#allocation3], %s13
      %s16 = sshll.u32 [#allocation2], 4
      %s17 = int_to_ptr.vmem [resolvable:$true] %s16
      %19 = dma.hbm_to_vmem [thread:$0]  %s0, 64, %s17, [#allocation3]
    $region5: #{tpu_custom_call.1} parent=1 // pred_fallthru
      _
    // Predicated region
    $region6: #{tpu_custom_call.1} parent=1 // pred_check
      _
    $region7: #{tpu_custom_call.1} parent=1 // pred_check_branch
      %21 = sbr.rel (0) target = $region9
    $region8: #{tpu_custom_call.1} parent=1 // pred_region
      %s23 = ssub.s32 64, 64
      %24 = vsyncadd [#allocation6], %s23
      %s26 = sshll.u32 [#allocation5], 4
      %s27 = int_to_ptr.vmem [resolvable:$true] %s26
      %29 = dma.hbm_to_vmem [thread:$0]  %s1, 64, %s27, [#allocation6]
    $region9: #{tpu_custom_call.1} parent=1 // pred_fallthru
      _
    // Predicated region
    $region10: #{tpu_custom_call.1} parent=1 // pred_check
      _
    $region11: #{tpu_custom_call.1} parent=1 // pred_check_branch
      %31 = sbr.rel (0) target = $region13
    $region12: #{tpu_custom_call.1} parent=1 // pred_region
      %32 = dma.done [#allocation3], 64
    $region13: #{tpu_custom_call.1} parent=1 // pred_fallthru
      _
    // Predicated region
    $region14: #{tpu_custom_call.1} parent=1 // pred_check
      _
    $region15: #{tpu_custom_call.1} parent=1 // pred_check_branch
      %34 = sbr.rel (0) target = $region17
    $region16: #{tpu_custom_call.1} parent=1 // pred_region
      %35 = dma.done [#allocation6], 64
    $region17: #{tpu_custom_call.1} parent=1 // pred_fallthru
      _
    %v36 = vld [vmem:[#allocation2] sm:$0xf]
    %v37 = vld [vmem:[#allocation5] sm:$0xf]
    %vm38 = vcmp.eq.f32.partialorder %v37, 1.0
    %vm39 = vcmp.eq.f32.partialorder %v37, 0.0
    %v40 = vmax.f32 %v36, 0.0
    %v41 = vand.u32 2147483647, %v36
    %v42 = vsub.f32 0.0, %v41
    %v43 = vmul.f32 %v42, 1.442695
    %v44 = vpow.pop %v43
    %v45 = vadd.f32 %v44, 1.0
    %v46 = vlog2.pop %v45
    %v47 = vmul.f32 %v46, 0.6931472
    %v48 = vmul.f32 -0.5, %v44
    %v49 = vadd.f32 %v48, 1.0
    %v50 = vmul.f32 %v49, %v44
    %v51 = vand.u32 2147483647, %v44
    %vm52 = vcmp.lt.f32.partialorder %v51, 0.0004427343
    %v53 = vsel %vm52, %v50, %v47
    %v54 = vadd.f32 %v40, %v53
    %v55 = vsel %vm38, 1, 0
    %v56 = vcvt.s32.f32 %v55
    %vm57 = vcmask 1043456
    %v58 = vsel %vm57, %v56, 0.0
    %v59 = vrot.slane %v58, 4
    %v60 = vadd.f32 %v58, %v59
    %v61 = vrot.slane %v60, 2
    %v62 = vadd.f32 %v60, %v61
    %v63 = vrot.slane %v62, 1
    %v64 = vadd.f32 %v62, %v63
    %vm65 = vcmask 1040384
    %v66 = vsel %vm65, %v64, 0.0
    %v67 = vadd.f32 %v66, 0.0
    %v68 = vsel %vm39, 1, 0
    %v69 = vcvt.s32.f32 %v68
    %v70 = vsel %vm57, %v69, 0.0
    %v71 = vrot.slane %v70, 4
    %v72 = vadd.f32 %v70, %v71
    %v73 = vrot.slane %v72, 2
    %v74 = vadd.f32 %v72, %v73
    %v75 = vrot.slane %v74, 1
    %v76 = vadd.f32 %v74, %v75
    %v77 = vsel %vm65, %v76, 0.0
    %v78 = vadd.f32 %v77, 0.0
    %v79 = vsub.f32 %v54, %v36
    %v80 = vsel %vm38, %v79, 0.0
    %v81 = vsel %vm57, %v80, 0.0
    %v82 = vrot.slane %v81, 4
    %v83 = vadd.f32 %v81, %v82
    %v84 = vrot.slane %v83, 2
    %v85 = vadd.f32 %v83, %v84
    %v86 = vrot.slane %v85, 1
    %v87 = vadd.f32 %v85, %v86
    %v88 = vsel %vm65, %v87, 0.0
    %v89 = vadd.f32 %v88, 0.0
    %v90 = vsel %vm39, %v54, 0.0
    %v91 = vsel %vm57, %v90, 0.0
    %v92 = vrot.slane %v91, 4
    %v93 = vadd.f32 %v91, %v92
    %v94 = vrot.slane %v93, 2
    %v95 = vadd.f32 %v93, %v94
    %v96 = vrot.slane %v95, 1
    %v97 = vadd.f32 %v95, %v96
    %v98 = vsel %vm65, %v97, 0.0
    %v99 = vadd.f32 %v98, 0.0
    %100 = vst [vmem:[#allocation7] sm:$0xff] %v67
    %101 = vst [vmem:[#allocation7 + $0x8] sm:$0xff] %v78
    %102 = vst [vmem:[#allocation7 + $0x10] sm:$0xff] %v89
    %103 = vst [vmem:[#allocation7 + $0x18] sm:$0xff] %v99
    // Predicated region
    $region18: #{tpu_custom_call.1} parent=1 // pred_check
      _
    $region19: #{tpu_custom_call.1} parent=1 // pred_check_branch
      %105 = sbr.rel (0) target = $region21
    $region20: #{tpu_custom_call.1} parent=1 // pred_region
      %s107 = ssub.s32 512, 512
      %108 = vsyncadd [#allocation4], %s107
      %s109 = sshll.u32 [#allocation7], 4
      %s110 = int_to_ptr.vmem [resolvable:$true] %s109
      %115 = dma.vmem_to_hbm [thread:$0]  %s110, 512, %s2, [#allocation4], 128, 128, 8
    $region21: #{tpu_custom_call.1} parent=1 // pred_fallthru
      _
    // Predicated region
    $region22: #{tpu_custom_call.1} parent=1 // pred_check
      _
    $region23: #{tpu_custom_call.1} parent=1 // pred_check_branch
      %117 = sbr.rel (0) target = $region25
    $region24: #{tpu_custom_call.1} parent=1 // pred_region
      %118 = dma.done [#allocation4], 512
    $region25: #{tpu_custom_call.1} parent=1 // pred_fallthru
      _
    %119 = vsyncpa [#allocation3], 1
    %120 = vsyncpa [#allocation6], 1
    %121 = vsyncpa [#allocation4], 1

</llo_original>
